<compile_context>
chip_gen: v6e
topology: v6e:2x2x1
jax: 0.10.0
libtpu: 0.0.40
codegen_flags: <defaults>
</compile_context>

<pallas_src>
import functools
import math

import jax
import jax.numpy as jnp
from jax import lax
from jax.experimental import pallas as pl
from jax.experimental.pallas import tpu as pltpu

PESQ_MIN = -0.5
PESQ_MAX = 4.5
_EPS = 1e-8

_MAX_TILE_B = 128
# Double-buffered input footprint target (2 inputs x 2 pipeline buffers).
# Sized for v7x's 64 MiB physical VMEM with headroom; trivially fits the
# 128 MiB of v5e/v6e.
_INPUT_VMEM_BUDGET = 32 * 1024 * 1024
_VMEM_LIMIT = 48 * 1024 * 1024


def _round_up(x, m):
    return ((x + m - 1) // m) * m


def _cdiv(a, b):
    return -(-a // b)


def _sublane_packing(dtype):
    # Rows per native vreg tile for this dtype: f32 -> 8, bf16 -> 16, int8 -> 32.
    return 8 * max(1, 4 // jnp.dtype(dtype).itemsize)


def _metric_pesq_kernel(clean_ref, enh_ref, sig_ref, noise_ref, *,
                        tile_t, kps, total_t, full_blocks, need_mask):
    """Grid = (split, b_tile, k); k is the time-reduction axis (last).

    clean_ref, enh_ref : [tile_b, tile_t] VMEM tiles (source dtype)
    sig_ref, noise_ref : [tile_b, 1] f32 resident output blocks (accumulators)
    """
    s = pl.program_id(0)
    k = pl.program_id(2)

    @pl.when(k == 0)
    def _init():
        sig_ref[...] = jnp.zeros_like(sig_ref)
        noise_ref[...] = jnp.zeros_like(noise_ref)

    # Cast after the DMA (keeps HBM traffic at the source dtype width).
    c = clean_ref[...].astype(jnp.float32)
    e = enh_ref[...].astype(jnp.float32)

    def _accum(cv, ev):
        err = cv - ev
        sig_ref[...] += jnp.sum(cv * cv, axis=-1, keepdims=True)
        noise_ref[...] += jnp.sum(err * err, axis=-1, keepdims=True)

    if need_mask:
        bk = s * kps + k  # global time-block index

        @pl.when(bk < full_blocks)
        def _full():
            _accum(c, e)

        @pl.when(bk >= full_blocks)
        def _ragged():
            # Ragged last block and/or fully out-of-range blocks of an uneven
            # 2-core split: zero out lanes beyond the real time extent.
            t_start = bk * tile_t
            lane = lax.broadcasted_iota(jnp.int32, c.shape, 1)
            m = (t_start + lane) < total_t
            _accum(jnp.where(m, c, 0.0), jnp.where(m, e, 0.0))
    else:
        _accum(c, e)


@functools.partial(jax.jit, static_argnames=("sr", "max_tile_t"))
def metric_pesq(clean, enhanced, sr=16000, max_tile_t=None):
    """Pallas implementation of MetricPESQ.forward.

    clean, enhanced: [B, T] arrays (any float dtype). Returns [B] float32
    scores in [0, 1]. `sr` is accepted for API parity (the surrogate score
    does not need it). `max_tile_t` is a test hook to force small time tiles.
    """
    assert clean.shape == enhanced.shape, "len(clean) must equal len(enhanced)"
    B, T = clean.shape

    # --- batch tile: full-B block for small B, else 128 rows ---------------
    tile_b = B if B <= _MAX_TILE_B else _MAX_TILE_B
    b_tiles = _cdiv(B, tile_b)

    # --- time tile from the VMEM budget (dtype/packing aware) --------------
    pad_b_c = _round_up(tile_b, _sublane_packing(clean.dtype))
    pad_b_e = _round_up(tile_b, _sublane_packing(enhanced.dtype))
    bytes_per_t = 2 * (pad_b_c * jnp.dtype(clean.dtype).itemsize
                       + pad_b_e * jnp.dtype(enhanced.dtype).itemsize)
    tile_t_budget = max(128, (_INPUT_VMEM_BUDGET // bytes_per_t) // 128 * 128)
    if max_tile_t is not None:
        tile_t_budget = min(tile_t_budget, max(128, (max_tile_t // 128) * 128))

    if T <= tile_t_budget:
        tile_t = T          # single full-extent time block; no mask needed
        n_t = 1
    else:
        n_t0 = _cdiv(T, tile_t_budget)
        tile_t = _round_up(_cdiv(T, n_t0), 128)   # balanced, <128 overshoot
        n_t = _cdiv(T, tile_t)

    # Split the time reduction across two cores (v7x megacore) whenever the
    # batch grid collapses to a single tile; harmless on single-TC chips.
    n_split = 2 if (b_tiles == 1 and n_t >= 2) else 1
    kps = _cdiv(n_t, n_split)
    full_blocks = T // tile_t
    need_mask = (n_split * kps) > full_blocks

    def _t_block(s, i, k):
        idx = s * kps + k
        if n_split * kps > n_t:            # uneven split: clamp the DMA index
            idx = jnp.minimum(idx, n_t - 1)
        return (i, idx)

    kernel = functools.partial(
        _metric_pesq_kernel, tile_t=tile_t, kps=kps, total_t=T,
        full_blocks=full_blocks, need_mask=need_mask)

    sig, noise = pl.pallas_call(
        kernel,
        out_shape=(jax.ShapeDtypeStruct((n_split, B, 1), jnp.float32),
                   jax.ShapeDtypeStruct((n_split, B, 1), jnp.float32)),
        grid_spec=pltpu.PrefetchScalarGridSpec(
            num_scalar_prefetch=0,
            grid=(n_split, b_tiles, kps),
            in_specs=[
                pl.BlockSpec((tile_b, tile_t), _t_block),
                pl.BlockSpec((tile_b, tile_t), _t_block),
            ],
            out_specs=(
                pl.BlockSpec((None, tile_b, 1), lambda s, i, k: (s, i, 0)),
                pl.BlockSpec((None, tile_b, 1), lambda s, i, k: (s, i, 0)),
            ),
        ),
        compiler_params=pltpu.CompilerParams(
            dimension_semantics=("parallel", "parallel", "arbitrary"),
            vmem_limit_bytes=_VMEM_LIMIT,
        ),
    )(clean, enhanced)

    sig = jnp.sum(sig[..., 0], axis=0)        # [B] combine per-core partials
    noise = jnp.sum(noise[..., 0], axis=0)    # [B]
    # snr_db = 10*log10(sig/noise); score = sigmoid(0.1 * snr_db).
    # The [-0.5, 4.5] rescale and (q+0.5)/5 normalization cancel exactly.
    z = (jnp.log(sig + _EPS) - jnp.log(noise + _EPS)) / math.log(10.0)
    return jax.nn.sigmoid(z)


def to_origin_range(v):
    """Inverse of the normalization, matching MetricPESQ.to_origin_range."""
    return v * (PESQ_MAX - PESQ_MIN) + PESQ_MIN


if __name__ == "__main__":
    import numpy as np

    def _ref_scores(c, e):
        c = c.astype(jnp.float32)
        e = e.astype(jnp.float32)
        sig = jnp.sum(c * c, axis=-1)
        noi = jnp.sum((c - e) ** 2, axis=-1)
        z = (jnp.log(sig + _EPS) - jnp.log(noi + _EPS)) / math.log(10.0)
        return np.asarray(jax.nn.sigmoid(z))

    key = jax.random.PRNGKey(0)
    k_clean, k_noise = jax.random.split(key)

    # Small-batch f32 case (single time tile, single-core split).
    B, T = 2, 512
    clean = jax.random.normal(k_clean, (B, T), dtype=jnp.float32)
    enhanced = clean + 0.1 * jax.random.normal(k_noise, (B, T), dtype=jnp.float32)

    scores = jax.block_until_ready(metric_pesq(clean, enhanced, sr=16000))
    assert scores.shape == (B,)
    assert bool(jnp.all(scores >= 0.0)) and bool(jnp.all(scores <= 1.0))
    np.testing.assert_allclose(np.asarray(scores), _ref_scores(clean, enhanced),
                               rtol=1e-3, atol=1e-4)

    orig = jax.block_until_ready(to_origin_range(scores))
    assert bool(jnp.all(orig >= PESQ_MIN)) and bool(jnp.all(orig <= PESQ_MAX))

    # Multi-tile path with ragged last time block and the 2-way time split
    # (tile_t forced small so the path is exercised at test-sized shapes).
    B2, T2 = 2, 1000
    c2 = jax.random.normal(jax.random.PRNGKey(1), (B2, T2), dtype=jnp.float32)
    e2 = c2 + 0.2 * jax.random.normal(jax.random.PRNGKey(2), (B2, T2),
                                      dtype=jnp.float32)
    s2 = jax.block_until_ready(metric_pesq(c2, e2, max_tile_t=256))
    assert s2.shape == (B2,)
    np.testing.assert_allclose(np.asarray(s2), _ref_scores(c2, e2),
                               rtol=1e-3, atol=1e-4)

    # bf16 inputs, odd batch (full-B block), non-128-aligned single time tile.
    B3, T3 = 3, 1000
    c3 = jax.random.normal(jax.random.PRNGKey(3), (B3, T3), dtype=jnp.bfloat16)
    e3 = c3 + jnp.bfloat16(0.2) * jax.random.normal(
        jax.random.PRNGKey(4), (B3, T3), dtype=jnp.bfloat16)
    s3 = jax.block_until_ready(metric_pesq(c3, e3))
    assert s3.shape == (B3,)
    assert bool(jnp.all(s3 >= 0.0)) and bool(jnp.all(s3 <= 1.0))
    np.testing.assert_allclose(np.asarray(s3), _ref_scores(c3, e3),
                               rtol=5e-3, atol=5e-3)

    print("KERNEL_OK")
</pallas_src>

<mosaic_0001>
module attributes {stable_mosaic.version = 11 : i64} {
  func.func @_metric_pesq_kernel(%arg0: i32, %arg1: i32, %arg2: i32, %arg3: memref<2x512xf32, #tpu.memory_space<vmem>>, %arg4: memref<2x512xf32, #tpu.memory_space<vmem>>, %arg5: memref<1x2x1xf32, #tpu.memory_space<vmem>>, %arg6: memref<1x2x1xf32, #tpu.memory_space<vmem>>) attributes {dimension_semantics = [#tpu.dimension_semantics<parallel>, #tpu.dimension_semantics<parallel>, #tpu.dimension_semantics<arbitrary>], iteration_bounds = array<i64: 1, 1, 1>, scalar_prefetch = 0 : i64, scratch_operands = 0 : i64, tpu.core_type = #tpu.core_type<tc>, window_params = [{transform_indices = @transform_0, window_bounds = array<i64: 2, 512>}, {transform_indices = @transform_1, window_bounds = array<i64: 2, 512>}, {transform_indices = @transform_2, window_bounds = array<i64: 1, 2, 1>}, {transform_indices = @transform_3, window_bounds = array<i64: 1, 2, 1>}]} {
    %c0_i32 = arith.constant 0 : i32
    %0 = arith.cmpi eq, %arg2, %c0_i32 : i32
    %1 = arith.extui %0 : i1 to i32
    %c0_i32_0 = arith.constant 0 : i32
    %2 = arith.cmpi ne, %1, %c0_i32_0 : i32
    scf.if %2 {
      %cst_17 = arith.constant 0.000000e+00 : f32
      %24 = vector.broadcast %cst_17 : f32 to vector<2x1xf32>
      %c0_18 = arith.constant 0 : index
      %c0_19 = arith.constant 0 : index
      %c0_20 = arith.constant 0 : index
      %25 = vector.load %arg5[%c0_18, %c0_19, %c0_20] : memref<1x2x1xf32, #tpu.memory_space<vmem>>, vector<1x2x1xf32>
      %26 = vector.shape_cast %25 : vector<1x2x1xf32> to vector<2x1xf32>
      %27 = vector.shape_cast %24 : vector<2x1xf32> to vector<1x2x1xf32>
      tpu.vector_store %arg5[%c0_18, %c0_19, %c0_20], %27 {strides = array<i32>} : memref<1x2x1xf32, #tpu.memory_space<vmem>>, vector<1x2x1xf32>,
      %cst_21 = arith.constant 0.000000e+00 : f32
      %28 = vector.broadcast %cst_21 : f32 to vector<2x1xf32>
      %c0_22 = arith.constant 0 : index
      %c0_23 = arith.constant 0 : index
      %c0_24 = arith.constant 0 : index
      %29 = vector.load %arg6[%c0_22, %c0_23, %c0_24] : memref<1x2x1xf32, #tpu.memory_space<vmem>>, vector<1x2x1xf32>
      %30 = vector.shape_cast %29 : vector<1x2x1xf32> to vector<2x1xf32>
      %31 = vector.shape_cast %28 : vector<2x1xf32> to vector<1x2x1xf32>
      tpu.vector_store %arg6[%c0_22, %c0_23, %c0_24], %31 {strides = array<i32>} : memref<1x2x1xf32, #tpu.memory_space<vmem>>, vector<1x2x1xf32>,
    } else {
    }
    %c0 = arith.constant 0 : index
    %c0_1 = arith.constant 0 : index
    %3 = vector.load %arg3[%c0, %c0_1] : memref<2x512xf32, #tpu.memory_space<vmem>>, vector<2x512xf32>
    %c0_2 = arith.constant 0 : index
    %c0_3 = arith.constant 0 : index
    %4 = vector.load %arg4[%c0_2, %c0_3] : memref<2x512xf32, #tpu.memory_space<vmem>>, vector<2x512xf32>
    %5 = arith.subf %3, %4 : vector<2x512xf32>
    %c0_4 = arith.constant 0 : index
    %c0_5 = arith.constant 0 : index
    %c0_6 = arith.constant 0 : index
    %6 = vector.load %arg5[%c0_4, %c0_5, %c0_6] : memref<1x2x1xf32, #tpu.memory_space<vmem>>, vector<1x2x1xf32>
    %7 = vector.shape_cast %6 : vector<1x2x1xf32> to vector<2x1xf32>
    %8 = arith.mulf %3, %3 : vector<2x512xf32>
    %cst = arith.constant dense<0.000000e+00> : vector<2xf32>
    %9 = vector.multi_reduction <add>, %8, %cst [1] : vector<2x512xf32> to vector<2xf32>
    %10 = vector.shape_cast %9 : vector<2xf32> to vector<2x1xf32>
    %11 = arith.addf %7, %10 : vector<2x1xf32>
    %c0_7 = arith.constant 0 : index
    %c0_8 = arith.constant 0 : index
    %c0_9 = arith.constant 0 : index
    %12 = vector.load %arg5[%c0_7, %c0_8, %c0_9] : memref<1x2x1xf32, #tpu.memory_space<vmem>>, vector<1x2x1xf32>
    %13 = vector.shape_cast %12 : vector<1x2x1xf32> to vector<2x1xf32>
    %14 = vector.shape_cast %11 : vector<2x1xf32> to vector<1x2x1xf32>
    tpu.vector_store %arg5[%c0_7, %c0_8, %c0_9], %14 {strides = array<i32>} : memref<1x2x1xf32, #tpu.memory_space<vmem>>, vector<1x2x1xf32>,
    %c0_10 = arith.constant 0 : index
    %c0_11 = arith.constant 0 : index
    %c0_12 = arith.constant 0 : index
    %15 = vector.load %arg6[%c0_10, %c0_11, %c0_12] : memref<1x2x1xf32, #tpu.memory_space<vmem>>, vector<1x2x1xf32>
    %16 = vector.shape_cast %15 : vector<1x2x1xf32> to vector<2x1xf32>
    %17 = arith.mulf %5, %5 : vector<2x512xf32>
    %cst_13 = arith.constant dense<0.000000e+00> : vector<2xf32>
    %18 = vector.multi_reduction <add>, %17, %cst_13 [1] : vector<2x512xf32> to vector<2xf32>
    %19 = vector.shape_cast %18 : vector<2xf32> to vector<2x1xf32>
    %20 = arith.addf %16, %19 : vector<2x1xf32>
    %c0_14 = arith.constant 0 : index
    %c0_15 = arith.constant 0 : index
    %c0_16 = arith.constant 0 : index
    %21 = vector.load %arg6[%c0_14, %c0_15, %c0_16] : memref<1x2x1xf32, #tpu.memory_space<vmem>>, vector<1x2x1xf32>
    %22 = vector.shape_cast %21 : vector<1x2x1xf32> to vector<2x1xf32>
    %23 = vector.shape_cast %20 : vector<2x1xf32> to vector<1x2x1xf32>
    tpu.vector_store %arg6[%c0_14, %c0_15, %c0_16], %23 {strides = array<i32>} : memref<1x2x1xf32, #tpu.memory_space<vmem>>, vector<1x2x1xf32>,
    return
  }
  func.func @transform_0(%arg0: i32, %arg1: i32, %arg2: i32) -> (i32, i32) {
    %c1_i32 = arith.constant 1 : i32
    %0 = arith.muli %arg0, %c1_i32 : i32
    %1 = arith.addi %0, %arg2 : i32
    %c0_i32 = arith.constant 0 : i32
    return %arg1, %1 : i32, i32
  }
  func.func @transform_1(%arg0: i32, %arg1: i32, %arg2: i32) -> (i32, i32) {
    %c1_i32 = arith.constant 1 : i32
    %0 = arith.muli %arg0, %c1_i32 : i32
    %1 = arith.addi %0, %arg2 : i32
    %c0_i32 = arith.constant 0 : i32
    return %arg1, %1 : i32, i32
  }
  func.func @transform_2(%arg0: i32, %arg1: i32, %arg2: i32) -> (i32, i32, i32) {
    %c0_i32 = arith.constant 0 : i32
    %c0_i32_0 = arith.constant 0 : i32
    return %arg0, %arg1, %c0_i32 : i32, i32, i32
  }
  func.func @transform_3(%arg0: i32, %arg1: i32, %arg2: i32) -> (i32, i32, i32) {
    %c0_i32 = arith.constant 0 : i32
    %c0_i32_0 = arith.constant 0 : i32
    return %arg0, %arg1, %c0_i32 : i32, i32, i32
  }
}

</mosaic_0001>

<llo_original>
// kernel: metric_pesq.1
$region0: #{metric_pesq.1}
  #allocation0 [shape = 'u32[]', space=smem, size = 0x4, offset = 0x4, fixed_abs, tag = 'smem constant byte address 0x4 - core index']
  #allocation1 [shape = 'u32[144,128]{1,0:T(1,128)}', space=vmem, size = 0x12000, scoped, tag = 'internal scratch']
  %s0 = inlined_call_operand.hbm [shape: f32[2,512], index: 0, kind: input, shape index: {}]
  %s1 = inlined_call_operand.hbm [shape: f32[2,512], index: 1, kind: input, shape index: {}]
  %s2 = inlined_call_operand.vmem [shape: f32[1,2,1], index: 2, kind: output, shape index: {0}]
  %s3 = inlined_call_operand.vmem [shape: f32[1,2,1], index: 3, kind: output, shape index: {1}]
  %4 = xla_tuple %s2, %s3
  %s5 = sld [smem:[#allocation0]]
  $region38: #{metric_pesq.1} parent=0
    _
  %s7 = ssub.s32 1, %s5
  %s8 = scalar_select 0, %s7, %s5
  $region1: #{metric_pesq.1} parent=0
    #allocation2 [shape = 'u8[4096]{0}', space=vmem, size = 0x1000, scoped, tag = 'input window, operand 0, single buffered']
    #allocation3 [shape = 's32[1]{0}', space=sflag, size = 0x4, scoped, tag = 'scoped memory for metric_pesq.1']
    #allocation4 [shape = 'u8[4096]{0}', space=vmem, size = 0x1000, scoped, tag = 'input window, operand 1, single buffered']
    #allocation5 [shape = 's32[1]{0}', space=sflag, size = 0x4, scoped, tag = 'scoped memory for metric_pesq.1']
    %9 = vsyncpa [#allocation3], 0
    %10 = vsyncpa [#allocation5], 0
    // Predicated region
    $region2: #{metric_pesq.1} parent=1 // pred_check
      _
    $region3: #{metric_pesq.1} parent=1 // pred_check_branch
      %12 = sbr.rel (0) target = $region5
    $region4: #{metric_pesq.1} parent=1 // pred_region
      %s13 = sadd.s32 0, 0
      %s14 = smul.u32 4, %s13
      %s16 = ssub.s32 128, 128
      %17 = vsyncadd [#allocation3], %s16
      %s18 = smul.addr %s14, 32
      %s19 = scalar_lea.hbm %s0, %s18
      %s21 = sshll.u32 [#allocation2], 4
      %s22 = int_to_ptr.vmem [resolvable:$true] %s21
      %24 = dma.hbm_to_vmem [thread:$0]  %s19, 128, %s22, [#allocation3]
    $region5: #{metric_pesq.1} parent=1 // pred_fallthru
      _
    // Predicated region
    $region6: #{metric_pesq.1} parent=1 // pred_check
      _
    $region7: #{metric_pesq.1} parent=1 // pred_check_branch
      %26 = sbr.rel (0) target = $region9
    $region8: #{metric_pesq.1} parent=1 // pred_region
      %s27 = sadd.s32 0, 0
      %s28 = smul.u32 4, %s27
      %s30 = ssub.s32 128, 128
      %31 = vsyncadd [#allocation5], %s30
      %s32 = smul.addr %s28, 32
      %s33 = scalar_lea.hbm %s1, %s32
      %s35 = sshll.u32 [#allocation4], 4
      %s36 = int_to_ptr.vmem [resolvable:$true] %s35
      %38 = dma.hbm_to_vmem [thread:$0]  %s33, 128, %s36, [#allocation5]
    $region9: #{metric_pesq.1} parent=1 // pred_fallthru
      _
    // Predicated region
    $region10: #{metric_pesq.1} parent=1 // pred_check
      _
    $region11: #{metric_pesq.1} parent=1 // pred_check_branch
      %40 = sbr.rel (0) target = $region13
    $region12: #{metric_pesq.1} parent=1 // pred_region
      %41 = dma.done [#allocation3], 128
    $region13: #{metric_pesq.1} parent=1 // pred_fallthru
      _
    // Predicated region
    $region14: #{metric_pesq.1} parent=1 // pred_check
      _
    $region15: #{metric_pesq.1} parent=1 // pred_check_branch
      %43 = sbr.rel (0) target = $region17
    $region16: #{metric_pesq.1} parent=1 // pred_region
      %44 = dma.done [#allocation5], 128
    $region17: #{metric_pesq.1} parent=1 // pred_fallthru
      _
    %s45 = sadd.s32 0, 0
    %s46 = smul.u32 4, %s45
    %s47 = sadd.s32 0, 0
    %s48 = smul.u32 4, %s47
    %p49 = scmp.eq.s32.totalorder 0, 0
    // Predicated region
    $region18: #{metric_pesq.1} parent=1 // pred_check
      %p50 = pneg %p49
    $region19: #{metric_pesq.1} parent=1 // pred_check_branch
      %52 = sbr.rel (%p50) target = $region21
    $region20: #{metric_pesq.1} parent=1 // pred_region
      %vm53 = vcmask 1024
      %54 = vst.msk [vmem:[%s2] sm:$0x3] %vm53, 0.0
      %55 = vst.msk [vmem:[%s3] sm:$0x3] %vm53, 0.0
    $region21: #{metric_pesq.1} parent=1 // pred_fallthru
      _
    %v56 = vld [vmem:[#allocation2] sm:$0xff]
    %v57 = vld [vmem:[#allocation4] sm:$0xff]
    %v58 = vsub.f32 %v56, %v57
    %v59 = vld [vmem:[%s2] sm:$0x3]
    %v60 = vmul.f32 %v56, %v56
    %v62 = vcombine.high %v60, %v60
    %v64 = vunpack.c.l.s4 1983009808
    %v65 = vunpack.c.0.s8 %v64
    %v66 = vlaneseq
    %v67 = vshrl.u32 %v66, 7
    %v68 = vsub.s32 %v65, %v67
    %v69 = vrot.slane %v60, %v68
    %v71 = vunpack.c.l.s4 1983009808
    %v72 = vunpack.c.0.s8 %v71
    %v73 = vlaneseq
    %v74 = vshrl.u32 %v73, 7
    %v75 = vsub.s32 %v72, %v74
    %v76 = vrot.slane %v62, %v75
    %v77 = vcombine.high %v69, %v69
    %v78 = vcombine.high %v76, %v76
    %vm83 = vcmask 1041408
    %v84 = vsel %vm83, %v69, 0.0
    %v85 = vsel %vm83, %v77, 0.0
    %v86 = vadd.f32 %v84, %v85
    %v87 = vsel %vm83, %v76, 0.0
    %v88 = vadd.f32 %v86, %v87
    %v89 = vsel %vm83, %v78, 0.0
    %v90 = vadd.f32 %v88, %v89
    %91 = vadd.xlane.f32.xlu0 %v90
    %v92 = vpop.xlane.xlu0 %91
    %v93 = vadd.f32 %v59, %v92
    %vm94 = vcmask 1024
    %95 = vst.msk [vmem:[%s2] sm:$0x3] %vm94, %v93
    %v96 = vld [vmem:[%s3] sm:$0x3]
    %v97 = vmul.f32 %v58, %v58
    %v99 = vcombine.high %v97, %v97
    %v101 = vunpack.c.l.s4 1983009808
    %v102 = vunpack.c.0.s8 %v101
    %v103 = vlaneseq
    %v104 = vshrl.u32 %v103, 7
    %v105 = vsub.s32 %v102, %v104
    %v106 = vrot.slane %v97, %v105
    %v108 = vunpack.c.l.s4 1983009808
    %v109 = vunpack.c.0.s8 %v108
    %v110 = vlaneseq
    %v111 = vshrl.u32 %v110, 7
    %v112 = vsub.s32 %v109, %v111
    %v113 = vrot.slane %v99, %v112
    %v114 = vcombine.high %v106, %v106
    %v115 = vcombine.high %v113, %v113
    %v120 = vsel %vm83, %v106, 0.0
    %v121 = vsel %vm83, %v114, 0.0
    %v122 = vadd.f32 %v120, %v121
    %v123 = vsel %vm83, %v113, 0.0
    %v124 = vadd.f32 %v122, %v123
    %v125 = vsel %vm83, %v115, 0.0
    %v126 = vadd.f32 %v124, %v125
    %127 = vadd.xlane.f32.xlu0 %v126
    %v128 = vpop.xlane.xlu0 %127
    %v129 = vadd.f32 %v96, %v128
    %130 = vst.msk [vmem:[%s3] sm:$0x3] %vm94, %v129
    // Predicated region
    $region22: #{metric_pesq.1} parent=1 // pred_check
      _
    $region23: #{metric_pesq.1} parent=1 // pred_check_branch
      %132 = sbr.rel (0) target = $region25
    $region24: #{metric_pesq.1} parent=1 // pred_region
      _
    $region25: #{metric_pesq.1} parent=1 // pred_fallthru
      _
    // Predicated region
    $region26: #{metric_pesq.1} parent=1 // pred_check
      _
    $region27: #{metric_pesq.1} parent=1 // pred_check_branch
      %134 = sbr.rel (0) target = $region29
    $region28: #{metric_pesq.1} parent=1 // pred_region
      _
    $region29: #{metric_pesq.1} parent=1 // pred_fallthru
      _
    // Predicated region
    $region30: #{metric_pesq.1} parent=1 // pred_check
      _
    $region31: #{metric_pesq.1} parent=1 // pred_check_branch
      %136 = sbr.rel (0) target = $region33
    $region32: #{metric_pesq.1} parent=1 // pred_region
      _
    $region33: #{metric_pesq.1} parent=1 // pred_fallthru
      _
    // Predicated region
    $region34: #{metric_pesq.1} parent=1 // pred_check
      _
    $region35: #{metric_pesq.1} parent=1 // pred_check_branch
      %138 = sbr.rel (0) target = $region37
    $region36: #{metric_pesq.1} parent=1 // pred_region
      _
    $region37: #{metric_pesq.1} parent=1 // pred_fallthru
      _
    %139 = vsyncpa [#allocation3], 1
    %140 = vsyncpa [#allocation5], 1

</llo_original>
